<compile_context>
chip_gen: v7x
topology: tpu7x:2x2x1
jax: 0.10.0
libtpu: 0.0.40
codegen_flags: <defaults>
</compile_context>

<pallas_src>
import functools

import jax
import jax.numpy as jnp
from jax.experimental import pallas as pl
from jax.experimental.pallas import tpu as pltpu


def _round_up(x, m):
    return ((x + m - 1) // m) * m


def _avg_consensus_kernel(x_ref, o_ref, *, inv_t):
    # x_ref: (B_BLK, T, C_BLK) VMEM tile; o_ref: (B_BLK, C_BLK) VMEM tile.
    x = x_ref[...].astype(jnp.float32)            # f32 accumulate (required on v5e)
    o_ref[...] = (jnp.sum(x, axis=1) * inv_t).astype(o_ref.dtype)


def _pick_blocks(n, t, c, itemsize, target_tile_bytes=8 << 20):
    """Choose (b_blk, c_blk) so padded tiles sit near the target size,
    output blocks are packed-sublane dense, and v7x's two TCs both get work."""
    sub = 32 // itemsize                 # packed sublane multiple: f32 8, bf16 16, int8 32
    t_pad = _round_up(t, sub)
    c_pad = _round_up(c, 128)

    # Channel block: full C unless even a minimal (sub-row) group blows the budget.
    min_row_group = sub * t_pad * c_pad * itemsize
    if c <= 128 or min_row_group <= target_tile_bytes:
        c_blk = c
    else:
        lane_groups = max(1, target_tile_bytes // (sub * t_pad * 128 * itemsize))
        c_blk = min(c_pad, lane_groups * 128)     # multiple of 128 (remainder block masked)
        if c_blk >= c:
            c_blk = c
    c_pad_blk = _round_up(c_blk, 128)
    c_steps = pl.cdiv(c, c_blk)

    # Batch block: as many rows as fit the (padded) budget, multiple of `sub`.
    row_bytes = t_pad * c_pad_blk * itemsize
    b_blk = max(sub, (target_tile_bytes // row_bytes // sub) * sub)

    # Megacore: guarantee >= 2 total grid steps when the shape permits (v7x: 2 TCs).
    if c_steps == 1 and n >= 2 * sub:
        half = _round_up(-(-n // 2), sub)
        b_blk = min(b_blk, half)

    if b_blk >= n:
        b_blk = n                         # full extent (always a legal block dim)
    return b_blk, c_blk, sub, t_pad


def avg_consensus(x, dim=1):
    """Pallas equivalent of AvgConsensus.forward (dim=1, keepdim=True)."""
    assert dim == 1, "kernel is written for consensus over dim=1 (layout N, T, C)"
    n, t, c = x.shape
    itemsize = jnp.dtype(x.dtype).itemsize

    b_blk, c_blk, sub, t_pad = _pick_blocks(n, t, c, itemsize)
    c_pad_blk = _round_up(c_blk, 128)

    # PADDED VMEM footprint: double-buffered input + output tiles + headroom.
    in_tile_bytes = b_blk * t_pad * c_pad_blk * itemsize
    out_tile_bytes = _round_up(b_blk, sub) * c_pad_blk * itemsize
    vmem_bytes = 2 * (in_tile_bytes + out_tile_bytes) + (2 << 20)
    vmem_bytes = min(max(vmem_bytes, 4 << 20), 48 << 20)

    grid = (pl.cdiv(n, b_blk), pl.cdiv(c, c_blk))
    kernel = functools.partial(_avg_consensus_kernel, inv_t=1.0 / t)

    out_2d = pl.pallas_call(
        kernel,
        out_shape=jax.ShapeDtypeStruct((n, c), x.dtype),
        grid=grid,
        in_specs=[pl.BlockSpec((b_blk, t, c_blk), lambda b, cb: (b, 0, cb))],
        out_specs=pl.BlockSpec((b_blk, c_blk), lambda b, cb: (b, cb)),
        compiler_params=pltpu.CompilerParams(
            dimension_semantics=("parallel", "parallel"),
            vmem_limit_bytes=vmem_bytes,
        ),
    )(x)

    # keepdim=True: cheap reshape outside the kernel (output is 1/T of the traffic).
    return out_2d.reshape(n, 1, c)


if __name__ == "__main__":
    key = jax.random.PRNGKey(0)

    # batch=2, num_segments=8, channels=32
    x = jax.random.normal(key, (2, 8, 32), dtype=jnp.float32)
    out = jax.block_until_ready(avg_consensus(x, dim=1))
    ref = jnp.mean(x, axis=1, keepdims=True)
    assert out.shape == (2, 1, 32), out.shape
    assert out.dtype == x.dtype
    assert jnp.allclose(out, ref, atol=1e-5, rtol=1e-5)

    # Larger, non-divisible batch: exercises the multi-block (>=2 grid steps) path.
    x2 = jax.random.normal(jax.random.PRNGKey(1), (70, 8, 32), dtype=jnp.float32)
    out2 = jax.block_until_ready(avg_consensus(x2, dim=1))
    ref2 = jnp.mean(x2, axis=1, keepdims=True)
    assert out2.shape == (70, 1, 32)
    assert jnp.allclose(out2, ref2, atol=1e-5, rtol=1e-5)

    # TSN-style shape: T=3 segments (not a sublane multiple), C=400 (not a lane multiple).
    x3 = jax.random.normal(jax.random.PRNGKey(2), (4, 3, 400), dtype=jnp.float32)
    out3 = jax.block_until_ready(avg_consensus(x3, dim=1))
    ref3 = jnp.mean(x3, axis=1, keepdims=True)
    assert out3.shape == (4, 1, 400)
    assert jnp.allclose(out3, ref3, atol=1e-5, rtol=1e-5)

    # bf16 path: exercises 16-row packed-sublane rounding and padded VMEM budgeting.
    x4 = jax.random.normal(jax.random.PRNGKey(3), (16, 8, 32), dtype=jnp.bfloat16)
    out4 = jax.block_until_ready(avg_consensus(x4, dim=1))
    ref4 = jnp.mean(x4.astype(jnp.float32), axis=1, keepdims=True)
    assert out4.shape == (16, 1, 32)
    assert out4.dtype == jnp.bfloat16
    assert jnp.allclose(out4.astype(jnp.float32), ref4, atol=2e-2, rtol=2e-2)

    print("KERNEL_OK")
</pallas_src>

<mosaic_0001>
module attributes {stable_mosaic.version = 11 : i64} {
  func.func @_avg_consensus_kernel(%arg0: i32, %arg1: i32, %arg2: memref<2x8x32xf32, #tpu.memory_space<vmem>>, %arg3: memref<2x32xf32, #tpu.memory_space<vmem>>) attributes {dimension_semantics = [#tpu.dimension_semantics<parallel>, #tpu.dimension_semantics<parallel>], iteration_bounds = array<i64: 1, 1>, scalar_prefetch = 0 : i64, scratch_operands = 0 : i64, tpu.core_type = #tpu.core_type<tc>, window_params = [{transform_indices = @transform_0, window_bounds = array<i64: 2, 8, 32>}, {transform_indices = @transform_1, window_bounds = array<i64: 2, 32>}]} {
    %c0 = arith.constant 0 : index
    %c0_0 = arith.constant 0 : index
    %c0_1 = arith.constant 0 : index
    %0 = vector.load %arg2[%c0, %c0_0, %c0_1] : memref<2x8x32xf32, #tpu.memory_space<vmem>>, vector<2x8x32xf32>
    %cst = arith.constant dense<0.000000e+00> : vector<2x32xf32>
    %1 = vector.multi_reduction <add>, %0, %cst [1] : vector<2x8x32xf32> to vector<2x32xf32>
    %cst_2 = arith.constant 1.250000e-01 : f32
    %2 = vector.broadcast %cst_2 : f32 to vector<2x32xf32>
    %3 = arith.mulf %1, %2 : vector<2x32xf32>
    %c0_3 = arith.constant 0 : index
    %c0_4 = arith.constant 0 : index
    %4 = vector.load %arg3[%c0_3, %c0_4] : memref<2x32xf32, #tpu.memory_space<vmem>>, vector<2x32xf32>
    tpu.vector_store %arg3[%c0_3, %c0_4], %3 {strides = array<i32>} : memref<2x32xf32, #tpu.memory_space<vmem>>, vector<2x32xf32>,
    return
  }
  func.func @transform_0(%arg0: i32, %arg1: i32) -> (i32, i32, i32) {
    %c0_i32 = arith.constant 0 : i32
    %c0_i32_0 = arith.constant 0 : i32
    return %arg0, %c0_i32, %arg1 : i32, i32, i32
  }
  func.func @transform_1(%arg0: i32, %arg1: i32) -> (i32, i32) {
    %c0_i32 = arith.constant 0 : i32
    return %arg0, %arg1 : i32, i32
  }
}

</mosaic_0001>

<llo_original>
// kernel: tpu_custom_call.1
$region0: #{tpu_custom_call.1}
  #allocation0 [shape = 'u32[]', space=smem, size = 0x4, offset = 0x4, fixed_abs, tag = 'smem constant byte address 0x4 - core index']
  #allocation1 [shape = 'u32[144,128]{1,0:T(1,128)}', space=vmem, size = 0x12000, scoped, tag = 'internal scratch']
  %s0 = inlined_call_operand.hbm [shape: f32[2,8,32], index: 0, kind: input, shape index: {}]
  %s1 = inlined_call_operand.hbm [shape: f32[2,32], index: 1, kind: output, shape index: {}]
  %s2 = sld [smem:[#allocation0]]
  $region18: #{tpu_custom_call.1} parent=0
    _
  %s4 = ssub.s32 1, %s2
  %s5 = scalar_select 0, %s4, %s2
  $region1: #{tpu_custom_call.1} parent=0
    #allocation2 [shape = 'u8[8192]{0}', space=vmem, size = 0x2000, scoped, tag = 'input window, operand 0, single buffered']
    #allocation3 [shape = 's32[1]{0}', space=sflag, size = 0x4, scoped, tag = 'scoped memory for tpu_custom_call.1']
    #allocation4 [shape = 's32[1]{0}', space=sflag, size = 0x4, scoped, tag = 'scoped memory for tpu_custom_call.1']
    #allocation5 [shape = 'u8[1024]{0}', space=vmem, size = 0x400, scoped, tag = 'output window, operand 0, single buffered']
    %6 = vsyncpa [#allocation3], 0
    %7 = vsyncpa [#allocation4], 0
    // Predicated region
    $region2: #{tpu_custom_call.1} parent=1 // pred_check
      _
    $region3: #{tpu_custom_call.1} parent=1 // pred_check_branch
      %9 = sbr.rel (0) target = $region5
    $region4: #{tpu_custom_call.1} parent=1 // pred_region
      %s11 = ssub.s32 256, 256
      %12 = vsyncadd [#allocation3], %s11
      %s13 = sshll.u32 [#allocation2], 4
      %s14 = int_to_ptr.vmem [resolvable:$true] %s13
      %19 = dma.hbm_to_vmem [thread:$0]  %s0, 256, %s14, [#allocation3], 128, 128, 8
    $region5: #{tpu_custom_call.1} parent=1 // pred_fallthru
      _
    // Predicated region
    $region6: #{tpu_custom_call.1} parent=1 // pred_check
      _
    $region7: #{tpu_custom_call.1} parent=1 // pred_check_branch
      %21 = sbr.rel (0) target = $region9
    $region8: #{tpu_custom_call.1} parent=1 // pred_region
      %22 = dma.done [#allocation3], 256
    $region9: #{tpu_custom_call.1} parent=1 // pred_fallthru
      _
    %v23 = vld [vmem:[#allocation2] sm:$0xff]
    %v24 = vld [vmem:[#allocation2 + $0x8] sm:$0xff]
    %vm25 = vcmask 261120
    %v26 = vsel %vm25, %v23, 0.0
    %v27 = vrot.slane %v26, 4
    %v28 = vadd.f32 %v26, %v27
    %v29 = vrot.slane %v28, 2
    %v30 = vadd.f32 %v28, %v29
    %v31 = vrot.slane %v30, 1
    %v32 = vadd.f32 %v30, %v31
    %v33 = vsel %vm25, %v24, 0.0
    %v34 = vrot.slane %v33, 4
    %v35 = vadd.f32 %v33, %v34
    %v36 = vrot.slane %v35, 2
    %v37 = vadd.f32 %v35, %v36
    %v38 = vrot.slane %v37, 1
    %v39 = vadd.f32 %v37, %v38
    %v40 = vmul.f32 %v32, 0.125
    %v41 = vmul.f32 %v39, 0.125
    %vm44 = vcmask 1041409
    %v45 = vsel %vm44, %v41, %v40
    %vm47 = vcmask 254976
    %48 = vst.msk [vmem:[#allocation5] sm:$0x3] %vm47, %v45
    // Predicated region
    $region10: #{tpu_custom_call.1} parent=1 // pred_check
      _
    $region11: #{tpu_custom_call.1} parent=1 // pred_check_branch
      %50 = sbr.rel (0) target = $region13
    $region12: #{tpu_custom_call.1} parent=1 // pred_region
      %s52 = ssub.s32 32, 32
      %53 = vsyncadd [#allocation4], %s52
      %s55 = sshll.u32 [#allocation5], 4
      %s56 = int_to_ptr.vmem [resolvable:$true] %s55
      %58 = dma.vmem_to_hbm [thread:$0]  %s56, 32, %s1, [#allocation4]
    $region13: #{tpu_custom_call.1} parent=1 // pred_fallthru
      _
    // Predicated region
    $region14: #{tpu_custom_call.1} parent=1 // pred_check
      _
    $region15: #{tpu_custom_call.1} parent=1 // pred_check_branch
      %60 = sbr.rel (0) target = $region17
    $region16: #{tpu_custom_call.1} parent=1 // pred_region
      %61 = dma.done [#allocation4], 32
    $region17: #{tpu_custom_call.1} parent=1 // pred_fallthru
      _
    %62 = vsyncpa [#allocation3], 1
    %63 = vsyncpa [#allocation4], 1

</llo_original>
